<compile_context>
chip_gen: v7x
topology: tpu7x:2x2x1
jax: 0.10.0
libtpu: 0.0.40
codegen_flags: <defaults>
</compile_context>

<pallas_src>
import jax
import jax.numpy as jnp
from jax.experimental import pallas as pl
from jax.experimental.pallas import tpu as pltpu

LANES = 128
_TARGET_TILE_ROWS = 1024          # rows are 4 KiB each -> ~4 MiB blocks
_RAGGED_BLOCK_ELEMS = 128 * 1024  # 1-D ragged path: 512 KiB (f32) per block

_VMEM_LIMIT_BYTES = {
    "v7x": 48 << 20,   # 64 MiB physical; leave headroom
    "v6e": 64 << 20,   # 128 MiB physical
    "v5e": 32 << 20,   # scoped default is only 16 MiB; raise explicitly
    "v5p": 32 << 20,
}


def _cdiv(a: int, b: int) -> int:
    return -(-a // b)


def _round_up(a: int, b: int) -> int:
    return _cdiv(a, b) * b


def _tpu_generation() -> str:
    """Best-effort chip-generation tag from the device kind string."""
    try:
        kind = jax.devices()[0].device_kind.lower()
    except Exception:
        return "unknown"
    if "v7" in kind or "tpu7" in kind:
        return "v7x"
    if "v6" in kind or "tpu6" in kind:
        return "v6e"
    if "v5" in kind and ("lite" in kind or "5e" in kind):
        return "v5e"
    if "v5" in kind:
        return "v5p"
    return "unknown"


def _min_sublanes(dtype) -> int:
    """Sublane packing granularity: 8 for 32-bit, 16 for 16-bit, 32 for 8-bit."""
    return {4: 8, 2: 16, 1: 32}[jnp.dtype(dtype).itemsize]


def _compute_dtype_for(dtype, gen: str):
    # Native bf16 compute only where the VPU/EUP support it; everything else
    # (f32, f16, fp8, and any dtype on v5e/older) widens to f32.
    if jnp.dtype(dtype) == jnp.dtype(jnp.bfloat16) and gen in ("v6e", "v7x"):
        return jnp.bfloat16
    return jnp.float32


def _make_kernel(compute_dtype):
    def kernel(alpha_ref, x_ref, o_ref):
        # alpha lives in SMEM: one compiled kernel for any alpha value.
        alpha = alpha_ref[0].astype(compute_dtype)
        x = x_ref[...].astype(compute_dtype)   # no-op on the native path
        o_ref[...] = jnp.tanh(alpha * x).astype(o_ref.dtype)
    return kernel


def _compiler_params(gen: str) -> pltpu.CompilerParams:
    return pltpu.CompilerParams(
        dimension_semantics=("parallel",),
        vmem_limit_bytes=_VMEM_LIMIT_BYTES.get(gen, 32 << 20),
    )


def _cost_estimate(n: int, itemsize: int) -> pl.CostEstimate:
    return pl.CostEstimate(
        flops=n, transcendentals=n, bytes_accessed=2 * n * itemsize
    )


def _pick_tile_rows(rows: int, min_sub: int, gen: str) -> int:
    """Pick the row-count of one (tile_rows, width) block."""
    if rows <= _TARGET_TILE_ROWS:
        # Small/medium input. On v7x split into two blocks so both
        # TensorCores stream; single-TC chips take the whole thing at once.
        if gen == "v7x" and rows >= 2 * min_sub:
            return _round_up(_cdiv(rows, 2), min_sub)
        return rows
    tile = _TARGET_TILE_ROWS
    if gen == "v7x":
        # Even grid only matters with 2 TCs, and only when the grid is small
        # enough that a one-block imbalance is noticeable.
        grid_len = _cdiv(rows, tile)
        if grid_len % 2 == 1 and grid_len < 8:
            alt = _TARGET_TILE_ROWS // 2          # still 2 MiB blocks
            if _cdiv(rows, alt) % 2 == 0:
                tile = alt
    return tile


def _run_2d(slab, alpha_arr, compute_dtype, gen, n_elems):
    rows, width = slab.shape
    min_sub = _min_sublanes(slab.dtype)
    tile_rows = _pick_tile_rows(rows, min_sub, gen)
    grid_len = _cdiv(rows, tile_rows)
    return pl.pallas_call(
        _make_kernel(compute_dtype),
        out_shape=jax.ShapeDtypeStruct((rows, width), slab.dtype),
        grid_spec=pltpu.PrefetchScalarGridSpec(
            num_scalar_prefetch=0,
            grid=(grid_len,),
            in_specs=[
                pl.BlockSpec(memory_space=pltpu.MemorySpace.SMEM),   # alpha
                pl.BlockSpec((tile_rows, width), lambda i: (i, 0)),
            ],
            out_specs=pl.BlockSpec((tile_rows, width), lambda i: (i, 0)),
        ),
        compiler_params=_compiler_params(gen),
        cost_estimate=_cost_estimate(n_elems, jnp.dtype(slab.dtype).itemsize),
    )(alpha_arr, slab)


def _run_1d(flat, alpha_arr, compute_dtype, gen):
    """Zero-copy ragged path: 1-D blocks, Pallas masks the partial last block."""
    n = flat.shape[0]
    blk = n if n <= _RAGGED_BLOCK_ELEMS else _RAGGED_BLOCK_ELEMS
    grid_len = _cdiv(n, blk)
    return pl.pallas_call(
        _make_kernel(compute_dtype),
        out_shape=jax.ShapeDtypeStruct((n,), flat.dtype),
        grid_spec=pltpu.PrefetchScalarGridSpec(
            num_scalar_prefetch=0,
            grid=(grid_len,),
            in_specs=[
                pl.BlockSpec(memory_space=pltpu.MemorySpace.SMEM),   # alpha
                pl.BlockSpec((blk,), lambda i: (i,)),
            ],
            out_specs=pl.BlockSpec((blk,), lambda i: (i,)),
        ),
        compiler_params=_compiler_params(gen),
        cost_estimate=_cost_estimate(n, jnp.dtype(flat.dtype).itemsize),
    )(alpha_arr, flat)


def scaled_tanh(x, alpha=1.0):
    """tanh(alpha * x) computed in a Pallas TPU kernel (forward only)."""
    dt = jnp.dtype(x.dtype)
    if not jnp.issubdtype(dt, jnp.floating) or dt.itemsize > 4:
        raise TypeError(
            f"scaled_tanh expects a TPU-native floating dtype, got {x.dtype}"
        )

    orig_shape = x.shape
    n = x.size
    if n == 0:
        return x

    gen = _tpu_generation()
    compute_dtype = _compute_dtype_for(dt, gen)
    alpha_arr = jnp.asarray([alpha], dtype=jnp.float32)

    min_sub = _min_sublanes(dt)
    width = min_sub * LANES            # lane-dense 4 KiB rows
    flat = x.reshape(-1)

    if n % width == 0:
        # Zero-copy aligned fast path: reshape into (rows, 4 KiB) slab.
        slab = flat.reshape(n // width, width)
        out = _run_2d(slab, alpha_arr, compute_dtype, gen, n)
        return out.reshape(orig_shape)

    # Ragged path: 1-D blocks, no pad, no trailing slice.
    try:
        out = _run_1d(flat, alpha_arr, compute_dtype, gen)
        return out.reshape(orig_shape)
    except Exception:
        # Defensive fallback (pays one pad + one slice pass over HBM).
        n_pad = _round_up(n, width)
        slab = jnp.pad(flat, (0, n_pad - n)).reshape(n_pad // width, width)
        out = _run_2d(slab, alpha_arr, compute_dtype, gen, n_pad)
        return out.reshape(-1)[:n].reshape(orig_shape)


class ScaledTanhPallas:
    """JAX/Pallas equivalent of the PyTorch ScaledTanh module."""

    def __init__(self, alpha=1.0):
        self.alpha = float(alpha)

    def __call__(self, x):
        return scaled_tanh(x, self.alpha)


if __name__ == "__main__":
    key = jax.random.PRNGKey(0)
    alpha = 1.5
    module = ScaledTanhPallas(alpha=alpha)

    # Main check: NCHW input, batch=2, channels=4, spatial=16x16 (aligned path).
    x = jax.random.normal(key, (2, 4, 16, 16), dtype=jnp.float32)
    out = jax.block_until_ready(module(x))
    ref = jnp.tanh(alpha * x)
    assert out.shape == x.shape
    assert out.dtype == x.dtype
    assert jnp.allclose(out, ref, atol=1e-6, rtol=1e-6), "f32 mismatch vs reference"

    # Ragged-size check (exercises the no-pad / no-slice 1-D path).
    y = jax.random.normal(jax.random.PRNGKey(1), (3, 5, 7, 11), dtype=jnp.float32)
    out_y = jax.block_until_ready(module(y))
    ref_y = jnp.tanh(alpha * y)
    assert out_y.shape == y.shape
    assert out_y.dtype == y.dtype
    assert jnp.allclose(out_y, ref_y, atol=1e-6, rtol=1e-6), "ragged mismatch"

    # bf16 check (native bf16 compute on v6e/v7x, f32 widen elsewhere).
    z = jax.random.normal(jax.random.PRNGKey(2), (2, 4, 16, 16),
                          dtype=jnp.float32).astype(jnp.bfloat16)
    out_z = jax.block_until_ready(module(z))
    ref_z = jnp.tanh(alpha * z.astype(jnp.float32))
    assert out_z.shape == z.shape
    assert out_z.dtype == z.dtype
    assert jnp.allclose(out_z.astype(jnp.float32), ref_z, atol=5e-2, rtol=5e-2), \
        "bf16 mismatch"

    print("KERNEL_OK")
</pallas_src>

<mosaic_0001>
module attributes {stable_mosaic.version = 11 : i64} {
  func.func @kernel(%arg0: i32, %arg1: memref<1xf32, #tpu.memory_space<smem>>, %arg2: memref<2x1024xf32, #tpu.memory_space<vmem>>, %arg3: memref<2x1024xf32, #tpu.memory_space<vmem>>) attributes {dimension_semantics = [#tpu.dimension_semantics<parallel>], iteration_bounds = array<i64: 1>, scalar_prefetch = 0 : i64, scratch_operands = 0 : i64, tpu.core_type = #tpu.core_type<tc>, window_params = [{transform_indices = @transform_0, window_bounds = array<i64: 1>}, {transform_indices = @transform_1, window_bounds = array<i64: 2, 1024>}, {transform_indices = @transform_2, window_bounds = array<i64: 2, 1024>}]} {
    %c0 = arith.constant 0 : index
    %0 = memref.load %arg1[%c0] : memref<1xf32, #tpu.memory_space<smem>>
    %c0_0 = arith.constant 0 : index
    %c0_1 = arith.constant 0 : index
    %1 = vector.load %arg2[%c0_0, %c0_1] : memref<2x1024xf32, #tpu.memory_space<vmem>>, vector<2x1024xf32>
    %2 = vector.broadcast %0 : f32 to vector<2x1024xf32>
    %3 = arith.mulf %2, %1 : vector<2x1024xf32>
    %4 = math.tanh %3 : vector<2x1024xf32>
    %c0_2 = arith.constant 0 : index
    %c0_3 = arith.constant 0 : index
    %5 = vector.load %arg3[%c0_2, %c0_3] : memref<2x1024xf32, #tpu.memory_space<vmem>>, vector<2x1024xf32>
    tpu.vector_store %arg3[%c0_2, %c0_3], %4 {strides = array<i32>} : memref<2x1024xf32, #tpu.memory_space<vmem>>, vector<2x1024xf32>,
    return
  }
  func.func @transform_0(%arg0: i32) -> i32 {
    %c0_i32 = arith.constant 0 : i32
    %c0_i32_0 = arith.constant 0 : i32
    return %c0_i32 : i32
  }
  func.func @transform_1(%arg0: i32) -> (i32, i32) {
    %c0_i32 = arith.constant 0 : i32
    %c0_i32_0 = arith.constant 0 : i32
    return %arg0, %c0_i32 : i32, i32
  }
  func.func @transform_2(%arg0: i32) -> (i32, i32) {
    %c0_i32 = arith.constant 0 : i32
    %c0_i32_0 = arith.constant 0 : i32
    return %arg0, %c0_i32 : i32, i32
  }
}

</mosaic_0001>

<llo_original>
// kernel: tpu_custom_call.1
$region0: #{tpu_custom_call.1}
  #allocation0 [shape = 'u32[]', space=smem, size = 0x4, offset = 0x4, fixed_abs, tag = 'smem constant byte address 0x4 - core index']
  #allocation1 [shape = 'u32[144,128]{1,0:T(1,128)}', space=vmem, size = 0x12000, scoped, tag = 'internal scratch']
  #allocation2 [shape = 'f32[1]{0:T(128)S(6)}', space=smem, size = 0x200, scoped, tag = 'scoped memory for tpu_custom_call.1']
  %s0 = inlined_call_operand.<no memory space> [shape: f32[1], index: 0, kind: input, shape index: {}]
  %s1 = inlined_call_operand.hbm [shape: f32[2,1024], index: 1, kind: input, shape index: {}]
  %s2 = inlined_call_operand.hbm [shape: f32[2,1024], index: 2, kind: output, shape index: {}]
  %s3 = sld [smem:[#allocation0]]
  $region22: #{tpu_custom_call.1} parent=0
    _
  %s5 = ssub.s32 1, %s3
  %s6 = scalar_select 0, %s5, %s3
  %7 = sst [smem:[#allocation2]] %s0
  $region1: #{tpu_custom_call.1} parent=0
    #allocation3 [shape = 'u8[8192]{0}', space=vmem, size = 0x2000, scoped, tag = 'input window, operand 1, single buffered']
    #allocation4 [shape = 's32[1]{0}', space=sflag, size = 0x4, scoped, tag = 'scoped memory for tpu_custom_call.1']
    #allocation5 [shape = 's32[1]{0}', space=sflag, size = 0x4, scoped, tag = 'scoped memory for tpu_custom_call.1']
    #allocation6 [shape = 'u8[8192]{0}', space=vmem, size = 0x2000, scoped, tag = 'output window, operand 0, single buffered']
    %8 = vsyncpa [#allocation4], 0
    %9 = vsyncpa [#allocation5], 0
    // Predicated region
    $region2: #{tpu_custom_call.1} parent=1 // pred_check
      _
    $region3: #{tpu_custom_call.1} parent=1 // pred_check_branch
      %11 = sbr.rel (0) target = $region5
    $region4: #{tpu_custom_call.1} parent=1 // pred_region
      _
    $region5: #{tpu_custom_call.1} parent=1 // pred_fallthru
      _
    // Predicated region
    $region6: #{tpu_custom_call.1} parent=1 // pred_check
      _
    $region7: #{tpu_custom_call.1} parent=1 // pred_check_branch
      %13 = sbr.rel (0) target = $region9
    $region8: #{tpu_custom_call.1} parent=1 // pred_region
      %s15 = ssub.s32 256, 256
      %16 = vsyncadd [#allocation4], %s15
      %s18 = sshll.u32 [#allocation3], 4
      %s19 = int_to_ptr.vmem [resolvable:$true] %s18
      %21 = dma.hbm_to_vmem [thread:$0]  %s1, 256, %s19, [#allocation4]
    $region9: #{tpu_custom_call.1} parent=1 // pred_fallthru
      _
    // Predicated region
    $region10: #{tpu_custom_call.1} parent=1 // pred_check
      _
    $region11: #{tpu_custom_call.1} parent=1 // pred_check_branch
      %23 = sbr.rel (0) target = $region13
    $region12: #{tpu_custom_call.1} parent=1 // pred_region
      %24 = dma.done [#allocation4], 256
    $region13: #{tpu_custom_call.1} parent=1 // pred_fallthru
      _
    %s25 = sld [smem:[#allocation2]]
    %v26 = vld [vmem:[#allocation3] sm:$0xff]
    %v27 = vld [vmem:[#allocation3 + $0x8] sm:$0xff]
    %v28 = vstv %s25
    %v29 = vmul.f32 %v28, %v26
    %v30 = vmul.f32 %v28, %v27
    %v31 = vtanh.pop %v29
    %v32 = vtanh.pop %v30
    %33 = vst [vmem:[#allocation6] sm:$0xff] %v31
    %34 = vst [vmem:[#allocation6 + $0x8] sm:$0xff] %v32
    // Predicated region
    $region14: #{tpu_custom_call.1} parent=1 // pred_check
      _
    $region15: #{tpu_custom_call.1} parent=1 // pred_check_branch
      %36 = sbr.rel (0) target = $region17
    $region16: #{tpu_custom_call.1} parent=1 // pred_region
      %s38 = ssub.s32 256, 256
      %39 = vsyncadd [#allocation5], %s38
      %s41 = sshll.u32 [#allocation6], 4
      %s42 = int_to_ptr.vmem [resolvable:$true] %s41
      %44 = dma.vmem_to_hbm [thread:$0]  %s42, 256, %s2, [#allocation5]
    $region17: #{tpu_custom_call.1} parent=1 // pred_fallthru
      _
    // Predicated region
    $region18: #{tpu_custom_call.1} parent=1 // pred_check
      _
    $region19: #{tpu_custom_call.1} parent=1 // pred_check_branch
      %46 = sbr.rel (0) target = $region21
    $region20: #{tpu_custom_call.1} parent=1 // pred_region
      %47 = dma.done [#allocation5], 256
    $region21: #{tpu_custom_call.1} parent=1 // pred_fallthru
      _
    %48 = vsyncpa [#allocation4], 1
    %49 = vsyncpa [#allocation5], 1

</llo_original>
